<compile_context>
chip_gen: v6e
topology: v6e:2x2x1
jax: 0.10.0
libtpu: 0.0.40
codegen_flags: <defaults>
</compile_context>

<pallas_src>
import functools

import jax
import jax.numpy as jnp
import numpy as np
from jax.experimental import pallas as pl
from jax.experimental.pallas import tpu as pltpu

NUM_PROJECTIONS = 50   # torch rand_projections default num_samples=50
P_PAD = 64             # pad 50 -> 64 so the fused z|e sort is exactly 128 lanes wide


def _sort_cols_ascending(x, n_rows):
    """Ascending sort of each column of a (N, P) array along axis 0.

    Mosaic has no lax.sort lowering, so we use an unrolled O(N^2) stable
    rank-and-select network (N is the small, static batch size). Produces the
    exact same sorted *values* as torch.sort(..., dim)[0].
    """
    row_idx = jax.lax.broadcasted_iota(jnp.int32, x.shape, 0)  # (N, P)
    out = jnp.zeros_like(x)
    for j in range(n_rows):
        xj = x[j:j + 1, :]                                          # (1, P)
        less = (x < xj).astype(jnp.int32)
        eq_before = jnp.logical_and(x == xj, row_idx < j).astype(jnp.int32)
        rank_j = jnp.sum(less + eq_before, axis=0, keepdims=True)   # (1, P)
        out = out + xj * (row_idx == rank_j).astype(x.dtype)
    return out


def latent_kernel(bw_ref, z_ref, logits_ref, e_ref, projt_ref,
                  probs_ref, zout_ref, losses_ref):
    z = z_ref[...]            # (N, D)
    logits = logits_ref[...]  # (N, D)
    e = e_ref[...]            # (N, D)
    projt = projt_ref[...]    # (D, P_PAD), zero-padded past NUM_PROJECTIONS
    n = z.shape[0]
    d_cols = logits.shape[1]

    # probs = softmax(logits, dim=0)  (softmax over the batch axis, per feature)
    m = jnp.max(logits, axis=0, keepdims=True)
    ex = jnp.exp(logits - m)
    sum_ex = jnp.sum(ex, axis=0, keepdims=True)
    probs = ex / sum_ex
    probs_ref[...] = probs

    # data['z'] = z * probs
    zout_ref[...] = z * probs

    # --- sliced-Wasserstein distance between z and e under random projections ---
    # One MXU pass for both operands: (2N, D) @ (D, P_PAD).
    ze = jnp.concatenate([z, e], axis=0)                                  # (2N, D)
    ze_proj = jnp.dot(ze, projt, preferred_element_type=jnp.float32)      # (2N, P_PAD)

    # One sort pass over a lane-dense (N, 2*P_PAD) = (N, 128) array.
    # Columns are sorted independently, so this is exactly two independent sorts.
    combined = jnp.concatenate([ze_proj[:n, :], ze_proj[n:, :]], axis=1)  # (N, 128)
    cs = _sort_cols_ascending(combined, n)
    diff = cs[:, :P_PAD] - cs[:, P_PAD:]                                  # (N, P_PAD)
    dist = diff * diff          # padded columns are identically 0 on both sides
    s = jnp.sum(jnp.sum(dist, axis=1, keepdims=True), axis=0, keepdims=True)
    swae = s * (1.0 / (n * NUM_PROJECTIONS))                              # (1, 1)

    # bottleneck_loss = mean(mean(-probs * log(probs + 1e-8) * w, dim=1))
    bw = bw_ref[0, 0]
    ent = -probs * jnp.log(probs + 1e-8)
    es = jnp.sum(jnp.sum(ent, axis=1, keepdims=True), axis=0, keepdims=True)
    bneck = es * (bw / (n * d_cols))                                      # (1, 1)

    # Single (1, 2) loss writeback instead of two padded (1, 1) tiles.
    losses_ref[...] = jnp.concatenate([swae, bneck], axis=1)


def prepare_projections(projections):
    """Hoisted pre-processing: (P, D) projections -> (D, P_PAD) f32, zero-padded."""
    projt = projections.astype(jnp.float32).T                 # (D, P)
    d, p = projt.shape
    if p < P_PAD:
        projt = jnp.concatenate(
            [projt, jnp.zeros((d, P_PAD - p), jnp.float32)], axis=1)
    return projt


@jax.jit
def _latent_call(bw, z, logits, e, projt):
    n, z_dim = z.shape
    out_shapes = (
        jax.ShapeDtypeStruct((n, z_dim), jnp.float32),   # probs
        jax.ShapeDtypeStruct((n, z_dim), jnp.float32),   # z * probs
        jax.ShapeDtypeStruct((1, 2), jnp.float32),       # [swae_loss, bottleneck_loss]
    )
    vmem = pl.BlockSpec(memory_space=pltpu.MemorySpace.VMEM)
    smem = pl.BlockSpec(memory_space=pltpu.MemorySpace.SMEM)
    return pl.pallas_call(
        latent_kernel,
        out_shape=out_shapes,
        in_specs=[smem, vmem, vmem, vmem, vmem],
        out_specs=(vmem, vmem, vmem),
    )(bw, z, logits, e, projt)


def latent_forward(data, bottleneck_weight, projt_padded):
    """Pallas-backed forward of the `Latent` module. Returns the updated data dict.

    `projt_padded` is the pre-transposed, zero-padded (z_dim, P_PAD) projection
    matrix from `prepare_projections` (computed once, not per call).
    """
    z = data['z_mean'].astype(jnp.float32)
    logits = data['z_logvar'].astype(jnp.float32)
    e = data['e'].astype(jnp.float32)
    bw = jnp.full((1, 1), bottleneck_weight, jnp.float32)

    probs, z_out, losses = _latent_call(bw, z, logits, e, projt_padded)

    out = dict(data)
    out['probs'] = probs
    out['z'] = z_out
    out['swae_loss'] = losses[0, 0]
    out['bottleneck_loss'] = losses[0, 1]
    return out


def latent_reference(data, bottleneck_weight, projections):
    """Pure-JAX reference mirroring the PyTorch forward, for validation."""
    z, logits, e = data['z_mean'], data['z_logvar'], data['e']
    probs = jax.nn.softmax(logits, axis=0)
    z_proj = z @ projections.T
    e_proj = e @ projections.T
    dist = jnp.sort(z_proj.T, axis=1) - jnp.sort(e_proj.T, axis=1)
    swae = jnp.mean(jnp.abs(dist) ** 2)
    ent = -probs * jnp.log(probs + 1e-8) * bottleneck_weight
    bneck = jnp.mean(jnp.mean(ent, axis=1))
    return probs, z * probs, swae, bneck


if __name__ == "__main__":
    key = jax.random.PRNGKey(0)
    kz, kl, ke, kp = jax.random.split(key, 4)

    N, Z_DIM = 8, 32
    data = {
        'z_mean':   jax.random.normal(kz, (N, Z_DIM), dtype=jnp.float32),
        'z_logvar': jax.random.normal(kl, (N, Z_DIM), dtype=jnp.float32),
        'e':        jax.random.normal(ke, (N, Z_DIM), dtype=jnp.float32),
    }
    bottleneck_weight = 0.5

    # rand_projections (deterministic): random unit vectors on the z_dim sphere
    unnormd = jax.random.normal(kp, (NUM_PROJECTIONS, Z_DIM), dtype=jnp.float32)
    projections = unnormd / jnp.linalg.norm(unnormd, axis=1, keepdims=True)

    # Hoisted once: transpose + cast + lane padding of the projection matrix.
    projt_padded = prepare_projections(projections)

    out = latent_forward(data, bottleneck_weight, projt_padded)
    out = jax.block_until_ready(out)

    # validate against pure-JAX reference
    r_probs, r_z, r_swae, r_bneck = latent_reference(data, bottleneck_weight, projections)
    np.testing.assert_allclose(np.asarray(out['probs']), np.asarray(r_probs), rtol=1e-5, atol=1e-5)
    np.testing.assert_allclose(np.asarray(out['z']), np.asarray(r_z), rtol=1e-5, atol=1e-5)
    np.testing.assert_allclose(float(out['swae_loss']), float(r_swae), rtol=1e-4, atol=1e-5)
    np.testing.assert_allclose(float(out['bottleneck_loss']), float(r_bneck), rtol=1e-5, atol=1e-6)

    print("KERNEL_OK")
</pallas_src>

<mosaic_0001>
module attributes {stable_mosaic.version = 11 : i64} {
  func.func @latent_kernel(%arg0: memref<1x1xf32, #tpu.memory_space<smem>>, %arg1: memref<8x32xf32, #tpu.memory_space<vmem>>, %arg2: memref<8x32xf32, #tpu.memory_space<vmem>>, %arg3: memref<8x32xf32, #tpu.memory_space<vmem>>, %arg4: memref<32x64xf32, #tpu.memory_space<vmem>>, %arg5: memref<8x32xf32, #tpu.memory_space<vmem>>, %arg6: memref<8x32xf32, #tpu.memory_space<vmem>>, %arg7: memref<1x2xf32, #tpu.memory_space<vmem>>) attributes {dimension_semantics = [], scalar_prefetch = 0 : i64, scratch_operands = 0 : i64, tpu.core_type = #tpu.core_type<tc>} {
    %c0 = arith.constant 0 : index
    %c0_0 = arith.constant 0 : index
    %0 = vector.load %arg1[%c0, %c0_0] : memref<8x32xf32, #tpu.memory_space<vmem>>, vector<8x32xf32>
    %c0_1 = arith.constant 0 : index
    %c0_2 = arith.constant 0 : index
    %1 = vector.load %arg2[%c0_1, %c0_2] : memref<8x32xf32, #tpu.memory_space<vmem>>, vector<8x32xf32>
    %c0_3 = arith.constant 0 : index
    %c0_4 = arith.constant 0 : index
    %2 = vector.load %arg3[%c0_3, %c0_4] : memref<8x32xf32, #tpu.memory_space<vmem>>, vector<8x32xf32>
    %c0_5 = arith.constant 0 : index
    %c0_6 = arith.constant 0 : index
    %3 = vector.load %arg4[%c0_5, %c0_6] : memref<32x64xf32, #tpu.memory_space<vmem>>, vector<32x64xf32>
    %cst = arith.constant dense<0xFF800000> : vector<32xf32>
    %4 = vector.multi_reduction <maximumf>, %1, %cst [0] : vector<8x32xf32> to vector<32xf32>
    %5 = vector.shape_cast %4 : vector<32xf32> to vector<1x32xf32>
    %6 = vector.broadcast %5 : vector<1x32xf32> to vector<8x32xf32>
    %7 = arith.subf %1, %6 : vector<8x32xf32>
    %8 = math.exp %7 : vector<8x32xf32>
    %cst_7 = arith.constant dense<0.000000e+00> : vector<32xf32>
    %9 = vector.multi_reduction <add>, %8, %cst_7 [0] : vector<8x32xf32> to vector<32xf32>
    %10 = vector.shape_cast %9 : vector<32xf32> to vector<1x32xf32>
    %11 = vector.broadcast %10 : vector<1x32xf32> to vector<8x32xf32>
    %12 = arith.divf %8, %11 : vector<8x32xf32>
    %c0_8 = arith.constant 0 : index
    %c0_9 = arith.constant 0 : index
    %13 = vector.load %arg5[%c0_8, %c0_9] : memref<8x32xf32, #tpu.memory_space<vmem>>, vector<8x32xf32>
    tpu.vector_store %arg5[%c0_8, %c0_9], %12 {strides = array<i32>} : memref<8x32xf32, #tpu.memory_space<vmem>>, vector<8x32xf32>,
    %14 = arith.mulf %0, %12 : vector<8x32xf32>
    %c0_10 = arith.constant 0 : index
    %c0_11 = arith.constant 0 : index
    %15 = vector.load %arg6[%c0_10, %c0_11] : memref<8x32xf32, #tpu.memory_space<vmem>>, vector<8x32xf32>
    tpu.vector_store %arg6[%c0_10, %c0_11], %14 {strides = array<i32>} : memref<8x32xf32, #tpu.memory_space<vmem>>, vector<8x32xf32>,
    %16 = tpu.concatenate %0, %2 in 0 : vector<8x32xf32>, vector<8x32xf32> -> vector<16x32xf32>
    %cst_12 = arith.constant dense<0.000000e+00> : vector<16x64xf32>
    %17 = tpu.matmul %16, %3, %cst_12 {dimension_numbers = #tpu.dot_dimension_numbers<[1], [0], [0], [1], [0, 0, 1, 1], [], []>} : vector<16x32xf32>, vector<32x64xf32>, vector<16x64xf32> -> vector<16x64xf32>
    %18 = vector.extract_strided_slice %17 {offsets = [0, 0], sizes = [8, 64], strides = [1, 1]} : vector<16x64xf32> to vector<8x64xf32>
    %19 = vector.extract_strided_slice %17 {offsets = [8, 0], sizes = [8, 64], strides = [1, 1]} : vector<16x64xf32> to vector<8x64xf32>
    %20 = tpu.concatenate %18, %19 in 1 : vector<8x64xf32>, vector<8x64xf32> -> vector<8x128xf32>
    %21 = tpu.iota {dimensions = array<i32: 0>} : vector<8x128xi32>
    %cst_13 = arith.constant 0.000000e+00 : f32
    %22 = vector.broadcast %cst_13 : f32 to vector<8x128xf32>
    %23 = vector.extract_strided_slice %20 {offsets = [0, 0], sizes = [1, 128], strides = [1, 1]} : vector<8x128xf32> to vector<1x128xf32>
    %24 = vector.broadcast %23 : vector<1x128xf32> to vector<8x128xf32>
    %25 = arith.cmpf olt, %20, %24 : vector<8x128xf32>
    %26 = arith.extui %25 : vector<8x128xi1> to vector<8x128xi32>
    %27 = vector.broadcast %23 : vector<1x128xf32> to vector<8x128xf32>
    %28 = arith.cmpf oeq, %20, %27 : vector<8x128xf32>
    %c0_i32 = arith.constant 0 : i32
    %29 = vector.broadcast %c0_i32 : i32 to vector<8x128xi32>
    %30 = arith.cmpi slt, %21, %29 : vector<8x128xi32>
    %31 = arith.andi %28, %30 : vector<8x128xi1>
    %32 = arith.extui %31 : vector<8x128xi1> to vector<8x128xi32>
    %33 = arith.addi %26, %32 : vector<8x128xi32>
    %cst_14 = arith.constant dense<0> : vector<128xi32>
    %34 = vector.multi_reduction <add>, %33, %cst_14 [0] : vector<8x128xi32> to vector<128xi32>
    %35 = vector.shape_cast %34 : vector<128xi32> to vector<1x128xi32>
    %36 = vector.broadcast %35 : vector<1x128xi32> to vector<8x128xi32>
    %37 = arith.cmpi eq, %21, %36 : vector<8x128xi32>
    %38 = arith.extui %37 : vector<8x128xi1> to vector<8x128xi32>
    %39 = arith.sitofp %38 : vector<8x128xi32> to vector<8x128xf32>
    %40 = vector.broadcast %23 : vector<1x128xf32> to vector<8x128xf32>
    %41 = arith.mulf %40, %39 : vector<8x128xf32>
    %42 = arith.addf %22, %41 : vector<8x128xf32>
    %43 = vector.extract_strided_slice %20 {offsets = [1, 0], sizes = [1, 128], strides = [1, 1]} : vector<8x128xf32> to vector<1x128xf32>
    %44 = vector.broadcast %43 : vector<1x128xf32> to vector<8x128xf32>
    %45 = arith.cmpf olt, %20, %44 : vector<8x128xf32>
    %46 = arith.extui %45 : vector<8x128xi1> to vector<8x128xi32>
    %47 = vector.broadcast %43 : vector<1x128xf32> to vector<8x128xf32>
    %48 = arith.cmpf oeq, %20, %47 : vector<8x128xf32>
    %c1_i32 = arith.constant 1 : i32
    %49 = vector.broadcast %c1_i32 : i32 to vector<8x128xi32>
    %50 = arith.cmpi slt, %21, %49 : vector<8x128xi32>
    %51 = arith.andi %48, %50 : vector<8x128xi1>
    %52 = arith.extui %51 : vector<8x128xi1> to vector<8x128xi32>
    %53 = arith.addi %46, %52 : vector<8x128xi32>
    %cst_15 = arith.constant dense<0> : vector<128xi32>
    %54 = vector.multi_reduction <add>, %53, %cst_15 [0] : vector<8x128xi32> to vector<128xi32>
    %55 = vector.shape_cast %54 : vector<128xi32> to vector<1x128xi32>
    %56 = vector.broadcast %55 : vector<1x128xi32> to vector<8x128xi32>
    %57 = arith.cmpi eq, %21, %56 : vector<8x128xi32>
    %58 = arith.extui %57 : vector<8x128xi1> to vector<8x128xi32>
    %59 = arith.sitofp %58 : vector<8x128xi32> to vector<8x128xf32>
    %60 = vector.broadcast %43 : vector<1x128xf32> to vector<8x128xf32>
    %61 = arith.mulf %60, %59 : vector<8x128xf32>
    %62 = arith.addf %42, %61 : vector<8x128xf32>
    %63 = vector.extract_strided_slice %20 {offsets = [2, 0], sizes = [1, 128], strides = [1, 1]} : vector<8x128xf32> to vector<1x128xf32>
    %64 = vector.broadcast %63 : vector<1x128xf32> to vector<8x128xf32>
    %65 = arith.cmpf olt, %20, %64 : vector<8x128xf32>
    %66 = arith.extui %65 : vector<8x128xi1> to vector<8x128xi32>
    %67 = vector.broadcast %63 : vector<1x128xf32> to vector<8x128xf32>
    %68 = arith.cmpf oeq, %20, %67 : vector<8x128xf32>
    %c2_i32 = arith.constant 2 : i32
    %69 = vector.broadcast %c2_i32 : i32 to vector<8x128xi32>
    %70 = arith.cmpi slt, %21, %69 : vector<8x128xi32>
    %71 = arith.andi %68, %70 : vector<8x128xi1>
    %72 = arith.extui %71 : vector<8x128xi1> to vector<8x128xi32>
    %73 = arith.addi %66, %72 : vector<8x128xi32>
    %cst_16 = arith.constant dense<0> : vector<128xi32>
    %74 = vector.multi_reduction <add>, %73, %cst_16 [0] : vector<8x128xi32> to vector<128xi32>
    %75 = vector.shape_cast %74 : vector<128xi32> to vector<1x128xi32>
    %76 = vector.broadcast %75 : vector<1x128xi32> to vector<8x128xi32>
    %77 = arith.cmpi eq, %21, %76 : vector<8x128xi32>
    %78 = arith.extui %77 : vector<8x128xi1> to vector<8x128xi32>
    %79 = arith.sitofp %78 : vector<8x128xi32> to vector<8x128xf32>
    %80 = vector.broadcast %63 : vector<1x128xf32> to vector<8x128xf32>
    %81 = arith.mulf %80, %79 : vector<8x128xf32>
    %82 = arith.addf %62, %81 : vector<8x128xf32>
    %83 = vector.extract_strided_slice %20 {offsets = [3, 0], sizes = [1, 128], strides = [1, 1]} : vector<8x128xf32> to vector<1x128xf32>
    %84 = vector.broadcast %83 : vector<1x128xf32> to vector<8x128xf32>
    %85 = arith.cmpf olt, %20, %84 : vector<8x128xf32>
    %86 = arith.extui %85 : vector<8x128xi1> to vector<8x128xi32>
    %87 = vector.broadcast %83 : vector<1x128xf32> to vector<8x128xf32>
    %88 = arith.cmpf oeq, %20, %87 : vector<8x128xf32>
    %c3_i32 = arith.constant 3 : i32
    %89 = vector.broadcast %c3_i32 : i32 to vector<8x128xi32>
    %90 = arith.cmpi slt, %21, %89 : vector<8x128xi32>
    %91 = arith.andi %88, %90 : vector<8x128xi1>
    %92 = arith.extui %91 : vector<8x128xi1> to vector<8x128xi32>
    %93 = arith.addi %86, %92 : vector<8x128xi32>
    %cst_17 = arith.constant dense<0> : vector<128xi32>
    %94 = vector.multi_reduction <add>, %93, %cst_17 [0] : vector<8x128xi32> to vector<128xi32>
    %95 = vector.shape_cast %94 : vector<128xi32> to vector<1x128xi32>
    %96 = vector.broadcast %95 : vector<1x128xi32> to vector<8x128xi32>
    %97 = arith.cmpi eq, %21, %96 : vector<8x128xi32>
    %98 = arith.extui %97 : vector<8x128xi1> to vector<8x128xi32>
    %99 = arith.sitofp %98 : vector<8x128xi32> to vector<8x128xf32>
    %100 = vector.broadcast %83 : vector<1x128xf32> to vector<8x128xf32>
    %101 = arith.mulf %100, %99 : vector<8x128xf32>
    %102 = arith.addf %82, %101 : vector<8x128xf32>
    %103 = vector.extract_strided_slice %20 {offsets = [4, 0], sizes = [1, 128], strides = [1, 1]} : vector<8x128xf32> to vector<1x128xf32>
    %104 = vector.broadcast %103 : vector<1x128xf32> to vector<8x128xf32>
    %105 = arith.cmpf olt, %20, %104 : vector<8x128xf32>
    %106 = arith.extui %105 : vector<8x128xi1> to vector<8x128xi32>
    %107 = vector.broadcast %103 : vector<1x128xf32> to vector<8x128xf32>
    %108 = arith.cmpf oeq, %20, %107 : vector<8x128xf32>
    %c4_i32 = arith.constant 4 : i32
    %109 = vector.broadcast %c4_i32 : i32 to vector<8x128xi32>
    %110 = arith.cmpi slt, %21, %109 : vector<8x128xi32>
    %111 = arith.andi %108, %110 : vector<8x128xi1>
    %112 = arith.extui %111 : vector<8x128xi1> to vector<8x128xi32>
    %113 = arith.addi %106, %112 : vector<8x128xi32>
    %cst_18 = arith.constant dense<0> : vector<128xi32>
    %114 = vector.multi_reduction <add>, %113, %cst_18 [0] : vector<8x128xi32> to vector<128xi32>
    %115 = vector.shape_cast %114 : vector<128xi32> to vector<1x128xi32>
    %116 = vector.broadcast %115 : vector<1x128xi32> to vector<8x128xi32>
    %117 = arith.cmpi eq, %21, %116 : vector<8x128xi32>
    %118 = arith.extui %117 : vector<8x128xi1> to vector<8x128xi32>
    %119 = arith.sitofp %118 : vector<8x128xi32> to vector<8x128xf32>
    %120 = vector.broadcast %103 : vector<1x128xf32> to vector<8x128xf32>
    %121 = arith.mulf %120, %119 : vector<8x128xf32>
    %122 = arith.addf %102, %121 : vector<8x128xf32>
    %123 = vector.extract_strided_slice %20 {offsets = [5, 0], sizes = [1, 128], strides = [1, 1]} : vector<8x128xf32> to vector<1x128xf32>
    %124 = vector.broadcast %123 : vector<1x128xf32> to vector<8x128xf32>
    %125 = arith.cmpf olt, %20, %124 : vector<8x128xf32>
    %126 = arith.extui %125 : vector<8x128xi1> to vector<8x128xi32>
    %127 = vector.broadcast %123 : vector<1x128xf32> to vector<8x128xf32>
    %128 = arith.cmpf oeq, %20, %127 : vector<8x128xf32>
    %c5_i32 = arith.constant 5 : i32
    %129 = vector.broadcast %c5_i32 : i32 to vector<8x128xi32>
    %130 = arith.cmpi slt, %21, %129 : vector<8x128xi32>
    %131 = arith.andi %128, %130 : vector<8x128xi1>
    %132 = arith.extui %131 : vector<8x128xi1> to vector<8x128xi32>
    %133 = arith.addi %126, %132 : vector<8x128xi32>
    %cst_19 = arith.constant dense<0> : vector<128xi32>
    %134 = vector.multi_reduction <add>, %133, %cst_19 [0] : vector<8x128xi32> to vector<128xi32>
    %135 = vector.shape_cast %134 : vector<128xi32> to vector<1x128xi32>
    %136 = vector.broadcast %135 : vector<1x128xi32> to vector<8x128xi32>
    %137 = arith.cmpi eq, %21, %136 : vector<8x128xi32>
    %138 = arith.extui %137 : vector<8x128xi1> to vector<8x128xi32>
    %139 = arith.sitofp %138 : vector<8x128xi32> to vector<8x128xf32>
    %140 = vector.broadcast %123 : vector<1x128xf32> to vector<8x128xf32>
    %141 = arith.mulf %140, %139 : vector<8x128xf32>
    %142 = arith.addf %122, %141 : vector<8x128xf32>
    %143 = vector.extract_strided_slice %20 {offsets = [6, 0], sizes = [1, 128], strides = [1, 1]} : vector<8x128xf32> to vector<1x128xf32>
    %144 = vector.broadcast %143 : vector<1x128xf32> to vector<8x128xf32>
    %145 = arith.cmpf olt, %20, %144 : vector<8x128xf32>
    %146 = arith.extui %145 : vector<8x128xi1> to vector<8x128xi32>
    %147 = vector.broadcast %143 : vector<1x128xf32> to vector<8x128xf32>
    %148 = arith.cmpf oeq, %20, %147 : vector<8x128xf32>
    %c6_i32 = arith.constant 6 : i32
    %149 = vector.broadcast %c6_i32 : i32 to vector<8x128xi32>
    %150 = arith.cmpi slt, %21, %149 : vector<8x128xi32>
    %151 = arith.andi %148, %150 : vector<8x128xi1>
    %152 = arith.extui %151 : vector<8x128xi1> to vector<8x128xi32>
    %153 = arith.addi %146, %152 : vector<8x128xi32>
    %cst_20 = arith.constant dense<0> : vector<128xi32>
    %154 = vector.multi_reduction <add>, %153, %cst_20 [0] : vector<8x128xi32> to vector<128xi32>
    %155 = vector.shape_cast %154 : vector<128xi32> to vector<1x128xi32>
    %156 = vector.broadcast %155 : vector<1x128xi32> to vector<8x128xi32>
    %157 = arith.cmpi eq, %21, %156 : vector<8x128xi32>
    %158 = arith.extui %157 : vector<8x128xi1> to vector<8x128xi32>
    %159 = arith.sitofp %158 : vector<8x128xi32> to vector<8x128xf32>
    %160 = vector.broadcast %143 : vector<1x128xf32> to vector<8x128xf32>
    %161 = arith.mulf %160, %159 : vector<8x128xf32>
    %162 = arith.addf %142, %161 : vector<8x128xf32>
    %163 = vector.extract_strided_slice %20 {offsets = [7, 0], sizes = [1, 128], strides = [1, 1]} : vector<8x128xf32> to vector<1x128xf32>
    %164 = vector.broadcast %163 : vector<1x128xf32> to vector<8x128xf32>
    %165 = arith.cmpf olt, %20, %164 : vector<8x128xf32>
    %166 = arith.extui %165 : vector<8x128xi1> to vector<8x128xi32>
    %167 = vector.broadcast %163 : vector<1x128xf32> to vector<8x128xf32>
    %168 = arith.cmpf oeq, %20, %167 : vector<8x128xf32>
    %c7_i32 = arith.constant 7 : i32
    %169 = vector.broadcast %c7_i32 : i32 to vector<8x128xi32>
    %170 = arith.cmpi slt, %21, %169 : vector<8x128xi32>
    %171 = arith.andi %168, %170 : vector<8x128xi1>
    %172 = arith.extui %171 : vector<8x128xi1> to vector<8x128xi32>
    %173 = arith.addi %166, %172 : vector<8x128xi32>
    %cst_21 = arith.constant dense<0> : vector<128xi32>
    %174 = vector.multi_reduction <add>, %173, %cst_21 [0] : vector<8x128xi32> to vector<128xi32>
    %175 = vector.shape_cast %174 : vector<128xi32> to vector<1x128xi32>
    %176 = vector.broadcast %175 : vector<1x128xi32> to vector<8x128xi32>
    %177 = arith.cmpi eq, %21, %176 : vector<8x128xi32>
    %178 = arith.extui %177 : vector<8x128xi1> to vector<8x128xi32>
    %179 = arith.sitofp %178 : vector<8x128xi32> to vector<8x128xf32>
    %180 = vector.broadcast %163 : vector<1x128xf32> to vector<8x128xf32>
    %181 = arith.mulf %180, %179 : vector<8x128xf32>
    %182 = arith.addf %162, %181 : vector<8x128xf32>
    %183 = vector.extract_strided_slice %182 {offsets = [0, 0], sizes = [8, 64], strides = [1, 1]} : vector<8x128xf32> to vector<8x64xf32>
    %184 = vector.extract_strided_slice %182 {offsets = [0, 64], sizes = [8, 64], strides = [1, 1]} : vector<8x128xf32> to vector<8x64xf32>
    %185 = arith.subf %183, %184 : vector<8x64xf32>
    %186 = arith.mulf %185, %185 : vector<8x64xf32>
    %cst_22 = arith.constant dense<0.000000e+00> : vector<8xf32>
    %187 = vector.multi_reduction <add>, %186, %cst_22 [1] : vector<8x64xf32> to vector<8xf32>
    %188 = vector.shape_cast %187 : vector<8xf32> to vector<8x1xf32>
    %cst_23 = arith.constant dense<0.000000e+00> : vector<1xf32>
    %189 = vector.multi_reduction <add>, %188, %cst_23 [0] : vector<8x1xf32> to vector<1xf32>
    %190 = vector.shape_cast %189 : vector<1xf32> to vector<1x1xf32>
    %cst_24 = arith.constant 2.500000e-03 : f32
    %191 = vector.broadcast %cst_24 : f32 to vector<1x1xf32>
    %192 = arith.mulf %190, %191 : vector<1x1xf32>
    %c0_25 = arith.constant 0 : index
    %c0_26 = arith.constant 0 : index
    %193 = memref.load %arg0[%c0_25, %c0_26] : memref<1x1xf32, #tpu.memory_space<smem>>
    %cst_27 = arith.constant 0.000000e+00 : f32
    %194 = vector.broadcast %cst_27 : f32 to vector<8x32xf32>
    %195 = arith.subf %194, %12 : vector<8x32xf32>
    %cst_28 = arith.constant 9.99999993E-9 : f32
    %196 = vector.broadcast %cst_28 : f32 to vector<8x32xf32>
    %197 = arith.addf %12, %196 : vector<8x32xf32>
    %198 = math.log %197 : vector<8x32xf32>
    %199 = arith.mulf %195, %198 : vector<8x32xf32>
    %cst_29 = arith.constant dense<0.000000e+00> : vector<8xf32>
    %200 = vector.multi_reduction <add>, %199, %cst_29 [1] : vector<8x32xf32> to vector<8xf32>
    %201 = vector.shape_cast %200 : vector<8xf32> to vector<8x1xf32>
    %cst_30 = arith.constant dense<0.000000e+00> : vector<1xf32>
    %202 = vector.multi_reduction <add>, %201, %cst_30 [0] : vector<8x1xf32> to vector<1xf32>
    %203 = vector.shape_cast %202 : vector<1xf32> to vector<1x1xf32>
    %cst_31 = arith.constant 2.560000e+02 : f32
    %204 = arith.divf %193, %cst_31 : f32
    %205 = vector.broadcast %204 : f32 to vector<1x1xf32>
    %206 = arith.mulf %203, %205 : vector<1x1xf32>
    %207 = tpu.concatenate %192, %206 in 1 : vector<1x1xf32>, vector<1x1xf32> -> vector<1x2xf32>
    %c0_32 = arith.constant 0 : index
    %c0_33 = arith.constant 0 : index
    %208 = vector.load %arg7[%c0_32, %c0_33] : memref<1x2xf32, #tpu.memory_space<vmem>>, vector<1x2xf32>
    tpu.vector_store %arg7[%c0_32, %c0_33], %207 {strides = array<i32>} : memref<1x2xf32, #tpu.memory_space<vmem>>, vector<1x2xf32>,
    return
  }
}

</mosaic_0001>

<llo_original>
// kernel: _latent_call.1
$region0: #{_latent_call.1}
  #allocation0 [shape = 'u32[]', space=smem, size = 0x4, offset = 0x4, fixed_abs, tag = 'smem constant byte address 0x4 - core index']
  #allocation1 [shape = 'u32[144,128]{1,0:T(1,128)}', space=vmem, size = 0x12000, scoped, tag = 'internal scratch']
  #allocation2 [shape = 'f32[1,1]{1,0:T(1,128)S(6)}', space=smem, size = 0x200, scoped, tag = 'scoped memory for _latent_call.1']
  %s0 = inlined_call_operand.<no memory space> [shape: f32[1,1], index: 0, kind: input, shape index: {}]
  %s1 = inlined_call_operand.hbm [shape: f32[8,32], index: 1, kind: input, shape index: {}]
  %s2 = inlined_call_operand.hbm [shape: f32[8,32], index: 2, kind: input, shape index: {}]
  %s3 = inlined_call_operand.hbm [shape: f32[8,32], index: 3, kind: input, shape index: {}]
  %s4 = inlined_call_operand.hbm [shape: f32[32,64], index: 4, kind: input, shape index: {}]
  %s5 = inlined_call_operand.hbm [shape: f32[8,32], index: 5, kind: output, shape index: {0}]
  %s6 = inlined_call_operand.hbm [shape: f32[8,32], index: 6, kind: output, shape index: {1}]
  %s7 = inlined_call_operand.hbm [shape: f32[1,2], index: 7, kind: output, shape index: {2}]
  %8 = xla_tuple %s5, %s6, %s7
  %s9 = sld [smem:[#allocation0]]
  $region62: #{_latent_call.1} parent=0
    _
  %s11 = ssub.s32 1, %s9
  %s12 = scalar_select 0, %s11, %s9
  %13 = sst [smem:[#allocation2]] %s0
  $region1: #{_latent_call.1} parent=0
    #allocation3 [shape = 'u8[4096]{0}', space=vmem, size = 0x1000, scoped, tag = 'input window, operand 1, single buffered']
    #allocation4 [shape = 's32[1]{0}', space=sflag, size = 0x4, scoped, tag = 'scoped memory for _latent_call.1']
    #allocation5 [shape = 's32[1]{0}', space=sflag, size = 0x4, scoped, tag = 'scoped memory for _latent_call.1']
    #allocation6 [shape = 'u8[4096]{0}', space=vmem, size = 0x1000, scoped, tag = 'input window, operand 2, single buffered']
    #allocation7 [shape = 's32[1]{0}', space=sflag, size = 0x4, scoped, tag = 'scoped memory for _latent_call.1']
    #allocation8 [shape = 'u8[4096]{0}', space=vmem, size = 0x1000, scoped, tag = 'input window, operand 3, single buffered']
    #allocation9 [shape = 'u8[16384]{0}', space=vmem, size = 0x4000, scoped, tag = 'input window, operand 4, single buffered']
    #allocation10 [shape = 's32[1]{0}', space=sflag, size = 0x4, scoped, tag = 'scoped memory for _latent_call.1']
    #allocation11 [shape = 'u8[4096]{0}', space=vmem, size = 0x1000, scoped, tag = 'output window, operand 0, single buffered']
    #allocation12 [shape = 'u8[4096]{0}', space=vmem, size = 0x1000, scoped, tag = 'output window, operand 1, single buffered']
    #allocation13 [shape = 's32[1]{0}', space=sflag, size = 0x4, scoped, tag = 'scoped memory for _latent_call.1']
    #allocation14 [shape = 'u8[512]{0}', space=vmem, size = 0x400, scoped, tag = 'output window, operand 2, single buffered']
    %14 = vsyncpa [#allocation4], 0
    %15 = vsyncpa [#allocation7], 0
    %16 = vsyncpa [#allocation10], 0
    %17 = vsyncpa [#allocation5], 0
    %18 = vsyncpa [#allocation13], 0
    // Predicated region
    $region2: #{_latent_call.1} parent=1 // pred_check
      _
    $region3: #{_latent_call.1} parent=1 // pred_check_branch
      %20 = sbr.rel (0) target = $region5
    $region4: #{_latent_call.1} parent=1 // pred_region
      _
    $region5: #{_latent_call.1} parent=1 // pred_fallthru
      _
    // Predicated region
    $region6: #{_latent_call.1} parent=1 // pred_check
      _
    $region7: #{_latent_call.1} parent=1 // pred_check_branch
      %22 = sbr.rel (0) target = $region9
    $region8: #{_latent_call.1} parent=1 // pred_region
      %s24 = ssub.s32 128, 128
      %25 = vsyncadd [#allocation4], %s24
      %s27 = sshll.u32 [#allocation3], 4
      %s28 = int_to_ptr.vmem [resolvable:$true] %s27
      %30 = dma.hbm_to_vmem [thread:$0]  %s1, 128, %s28, [#allocation4]
    $region9: #{_latent_call.1} parent=1 // pred_fallthru
      _
    // Predicated region
    $region10: #{_latent_call.1} parent=1 // pred_check
      _
    $region11: #{_latent_call.1} parent=1 // pred_check_branch
      %32 = sbr.rel (0) target = $region13
    $region12: #{_latent_call.1} parent=1 // pred_region
      %s34 = ssub.s32 128, 128
      %35 = vsyncadd [#allocation7], %s34
      %s37 = sshll.u32 [#allocation6], 4
      %s38 = int_to_ptr.vmem [resolvable:$true] %s37
      %40 = dma.hbm_to_vmem [thread:$0]  %s2, 128, %s38, [#allocation7]
    $region13: #{_latent_call.1} parent=1 // pred_fallthru
      _
    // Predicated region
    $region14: #{_latent_call.1} parent=1 // pred_check
      _
    $region15: #{_latent_call.1} parent=1 // pred_check_branch
      %42 = sbr.rel (0) target = $region17
    $region16: #{_latent_call.1} parent=1 // pred_region
      %s44 = ssub.s32 128, 128
      %45 = vsyncadd [#allocation7], %s44
      %s47 = sshll.u32 [#allocation8], 4
      %s48 = int_to_ptr.vmem [resolvable:$true] %s47
      %50 = dma.hbm_to_vmem [thread:$0]  %s3, 128, %s48, [#allocation7]
    $region17: #{_latent_call.1} parent=1 // pred_fallthru
      _
    // Predicated region
    $region18: #{_latent_call.1} parent=1 // pred_check
      _
    $region19: #{_latent_call.1} parent=1 // pred_check_branch
      %52 = sbr.rel (0) target = $region21
    $region20: #{_latent_call.1} parent=1 // pred_region
      %s54 = ssub.s32 512, 512
      %55 = vsyncadd [#allocation10], %s54
      %s56 = sshll.u32 [#allocation9], 4
      %s57 = int_to_ptr.vmem [resolvable:$true] %s56
      %62 = dma.hbm_to_vmem [thread:$0]  %s4, 512, %s57, [#allocation10], 128, 128, 8
    $region21: #{_latent_call.1} parent=1 // pred_fallthru
      _
    // Predicated region
    $region22: #{_latent_call.1} parent=1 // pred_check
      _
    $region23: #{_latent_call.1} parent=1 // pred_check_branch
      %64 = sbr.rel (0) target = $region25
    $region24: #{_latent_call.1} parent=1 // pred_region
      %65 = dma.done [#allocation4], 128
    $region25: #{_latent_call.1} parent=1 // pred_fallthru
      _
    // Predicated region
    $region26: #{_latent_call.1} parent=1 // pred_check
      _
    $region27: #{_latent_call.1} parent=1 // pred_check_branch
      %67 = sbr.rel (0) target = $region29
    $region28: #{_latent_call.1} parent=1 // pred_region
      %68 = dma.done [#allocation7], 128
    $region29: #{_latent_call.1} parent=1 // pred_fallthru
      _
    // Predicated region
    $region30: #{_latent_call.1} parent=1 // pred_check
      _
    $region31: #{_latent_call.1} parent=1 // pred_check_branch
      %70 = sbr.rel (0) target = $region33
    $region32: #{_latent_call.1} parent=1 // pred_region
      %71 = dma.done [#allocation7], 128
    $region33: #{_latent_call.1} parent=1 // pred_fallthru
      _
    // Predicated region
    $region34: #{_latent_call.1} parent=1 // pred_check
      _
    $region35: #{_latent_call.1} parent=1 // pred_check_branch
      %73 = sbr.rel (0) target = $region37
    $region36: #{_latent_call.1} parent=1 // pred_region
      %74 = dma.done [#allocation10], 512
    $region37: #{_latent_call.1} parent=1 // pred_fallthru
      _
    %v75 = vld [vmem:[#allocation3] sm:$0xff]
    %v76 = vld [vmem:[#allocation6] sm:$0xff]
    %v77 = vld [vmem:[#allocation8] sm:$0xff]
    %v78 = vld [vmem:[#allocation9] sm:$0xff]
    %v79 = vld [vmem:[#allocation9 + $0x8] sm:$0xff]
    %v80 = vld [vmem:[#allocation9 + $0x10] sm:$0xff]
    %v81 = vld [vmem:[#allocation9 + $0x18] sm:$0xff]
    %vm82 = vcmask 261120
    %v83 = vsel %vm82, %v76, -inf
    %v84 = vrot.slane %v83, 4
    %v85 = vmax.f32 %v83, %v84
    %v86 = vrot.slane %v85, 2
    %v87 = vmax.f32 %v85, %v86
    %v88 = vrot.slane %v87, 1
    %v89 = vmax.f32 %v87, %v88
    %v90 = vsub.f32 %v76, %v89
    %v91 = vmul.f32 %v90, 1.442695
    %v92 = vpow.pop %v91
    %v93 = vsel %vm82, %v92, 0.0
    %v94 = vrot.slane %v93, 4
    %v95 = vadd.f32 %v93, %v94
    %v96 = vrot.slane %v95, 2
    %v97 = vadd.f32 %v95, %v96
    %v98 = vrot.slane %v97, 1
    %v99 = vadd.f32 %v97, %v98
    %v100 = vrcp.pop %v99
    %v101 = vmul.f32 %v92, %v100
    %102 = vst.msk [vmem:[#allocation11] sm:$0xff] %vm82, %v101
    %v103 = vmul.f32 %v75, %v101
    %104 = vst.msk [vmem:[#allocation12] sm:$0xff] %vm82, %v103
    %v106 = vsel %vm82, %v75, 0
    %v109 = vsel %vm82, %v77, 0
    %111 = vmatprep.subr.mxu0 0.0
    %112 = vmatpush1.msra.mxu0 0.0
    %113 = vmatprep.subr.mxu0 0.0
    %114 = vmatpush1.msra.mxu0 0.0
    %115 = vmatprep.subr.mxu0 0.0
    %116 = vmatpush1.msra.mxu0 0.0
    %117 = vmatprep.subr.mxu0 0.0
    %118 = vmatpush1.msra.mxu0 0.0
    %119 = vmatprep.subr.mxu0 0.0
    %120 = vmatpush1.msra.mxu0 0.0
    %121 = vmatprep.subr.mxu0 0.0
    %122 = vmatpush1.msra.mxu0 0.0
    %123 = vmatprep.subr.mxu0 0.0
    %124 = vmatpush1.msra.mxu0 0.0
    %125 = vmatprep.subr.mxu0 0.0
    %126 = vmatpush1.msra.mxu0 0.0
    %127 = vmatprep.subr.mxu0 0.0
    %128 = vmatpush1.msra.mxu0 0.0
    %129 = vmatprep.subr.mxu0 0.0
    %130 = vmatpush1.msra.mxu0 0.0
    %131 = vmatprep.subr.mxu0 0.0
    %132 = vmatpush1.msra.mxu0 0.0
    %133 = vmatprep.subr.mxu0 0.0
    %134 = vmatpush1.msra.mxu0 0.0
    %135 = vmatprep.subr.mxu0 0.0
    %136 = vmatpush1.msra.mxu0 %v81
    %137 = vmatprep.subr.mxu0 0.0
    %138 = vmatpush1.msra.mxu0 %v80
    %139 = vmatprep.subr.mxu0 0.0
    %140 = vmatpush1.msra.mxu0 %v79
    %141 = vmatprep.subr.mxu0 0.0
    %142 = vmatpush1.msra.mxu0 %v78
    %143 = vmatprep.subr.mxu0 0.0
    %144 = vmatpush2.msra.mxu0 0.0
    %145 = vmatprep.subr.mxu0 0.0
    %146 = vmatpush2.msra.mxu0 0.0
    %147 = vmatprep.subr.mxu0 0.0
    %148 = vmatpush2.msra.mxu0 0.0
    %149 = vmatprep.subr.mxu0 0.0
    %150 = vmatpush2.msra.mxu0 0.0
    %151 = vmatprep.subr.mxu0 0.0
    %152 = vmatpush2.msra.mxu0 0.0
    %153 = vmatprep.subr.mxu0 0.0
    %154 = vmatpush2.msra.mxu0 0.0
    %155 = vmatprep.subr.mxu0 0.0
    %156 = vmatpush2.msra.mxu0 0.0
    %157 = vmatprep.subr.mxu0 0.0
    %158 = vmatpush2.msra.mxu0 0.0
    %159 = vmatprep.subr.mxu0 0.0
    %160 = vmatpush2.msra.mxu0 0.0
    %161 = vmatprep.subr.mxu0 0.0
    %162 = vmatpush2.msra.mxu0 0.0
    %163 = vmatprep.subr.mxu0 0.0
    %164 = vmatpush2.msra.mxu0 0.0
    %165 = vmatprep.subr.mxu0 0.0
    %166 = vmatpush2.msra.mxu0 0.0
    %167 = vmatprep.subr.mxu0 0.0
    %168 = vmatpush2.msra.mxu0 0.0
    %169 = vmatprep.subr.mxu0 0.0
    %170 = vmatpush2.msra.mxu0 0.0
    %171 = vmatprep.subr.mxu0 0.0
    %172 = vmatpush2.msra.mxu0 0.0
    %173 = vmatprep.subr.mxu0 0.0
    %174 = vmatpush2.msra.mxu0 0.0
    %175 = vmatprep.mubr.f32.mxu0 0.0
    %176 = vmatmul.mubr.f32.gmra.mxu0 %v106
    %v177 = vpop.f32.mrf.mxu0
    %v178 = vadd.f32 0.0, %v177
    %v179 = vpop.f32.mrf.mxu0
    %180 = vmatprep.mubr.f32.mxu0 0.0
    %181 = vmatmul.mubr.f32.gmra.mxu0 %v109
    %v182 = vpop.f32.mrf.mxu0
    %v183 = vadd.f32 0.0, %v182
    %v184 = vpop.f32.mrf.mxu0
    %185 = vdwg.mxu0
    %187 = vrot.lane.b32.xlu0 %v183, 64
    %v188 = vpop.permute.xlu0 %187
    %vm190 = vcmask 523264
    %v191 = vsel %vm190, %v178, %v188
    %v192 = vlaneseq
    %v193 = vshrl.u32 %v192, 7
    %v194 = vlaneseq
    %v195 = vshrl.u32 %v194, 7
    %v196 = vsub.s32 0, %v195
    %v197 = vrot.slane %v191, %v196
    %vm198 = vcmp.lt.f32.partialorder %v191, %v197
    %v199 = vsel %vm198, 1, 0
    %vm200 = vcmp.eq.f32.partialorder %v191, %v197
    %vm201 = vcmp.lt.s32.totalorder %v193, 0
    %vm202 = vmand %vm200, %vm201
    %v203 = vsel %vm202, 1, 0
    %v204 = vadd.s32 %v199, %v203
    %v205 = vrot.slane %v204, 4
    %v206 = vadd.s32 %v204, %v205
    %v207 = vrot.slane %v206, 2
    %v208 = vadd.s32 %v206, %v207
    %v209 = vrot.slane %v208, 1
    %v210 = vadd.s32 %v208, %v209
    %vm211 = vcmp.eq.s32.totalorder %v193, %v210
    %v212 = vsel %vm211, 1, 0
    %v213 = vcvt.s32.f32 %v212
    %v214 = vmul.f32 %v197, %v213
    %v215 = vadd.f32 %v214, 0.0
    %v216 = vlaneseq
    %v217 = vshrl.u32 %v216, 7
    %v218 = vsub.s32 1, %v217
    %v219 = vrot.slane %v191, %v218
    %vm220 = vcmp.lt.f32.partialorder %v191, %v219
    %v221 = vsel %vm220, 1, 0
    %vm222 = vcmp.eq.f32.partialorder %v191, %v219
    %vm223 = vcmp.lt.s32.totalorder %v193, 1
    %vm224 = vmand %vm222, %vm223
    %v225 = vsel %vm224, 1, 0
    %v226 = vadd.s32 %v221, %v225
    %v227 = vrot.slane %v226, 4
    %v228 = vadd.s32 %v226, %v227
    %v229 = vrot.slane %v228, 2
    %v230 = vadd.s32 %v228, %v229
    %v231 = vrot.slane %v230, 1
    %v232 = vadd.s32 %v230, %v231
    %vm233 = vcmp.eq.s32.totalorder %v193, %v232
    %v234 = vsel %vm233, 1, 0
    %v235 = vcvt.s32.f32 %v234
    %v236 = vmul.f32 %v219, %v235
    %v237 = vadd.f32 %v215, %v236
    %v238 = vlaneseq
    %v239 = vshrl.u32 %v238, 7
    %v240 = vsub.s32 2, %v239
    %v241 = vrot.slane %v191, %v240
    %vm242 = vcmp.lt.f32.partialorder %v191, %v241
    %v243 = vsel %vm242, 1, 0
    %vm244 = vcmp.eq.f32.partialorder %v191, %v241
    %vm245 = vcmp.lt.s32.totalorder %v193, 2
    %vm246 = vmand %vm244, %vm245
    %v247 = vsel %vm246, 1, 0
    %v248 = vadd.s32 %v243, %v247
    %v249 = vrot.slane %v248, 4
    %v250 = vadd.s32 %v248, %v249
    %v251 = vrot.slane %v250, 2
    %v252 = vadd.s32 %v250, %v251
    %v253 = vrot.slane %v252, 1
    %v254 = vadd.s32 %v252, %v253
    %vm255 = vcmp.eq.s32.totalorder %v193, %v254
    %v256 = vsel %vm255, 1, 0
    %v257 = vcvt.s32.f32 %v256
    %v258 = vmul.f32 %v241, %v257
    %v259 = vadd.f32 %v237, %v258
    %v260 = vlaneseq
    %v261 = vshrl.u32 %v260, 7
    %v262 = vsub.s32 3, %v261
    %v263 = vrot.slane %v191, %v262
    %vm264 = vcmp.lt.f32.partialorder %v191, %v263
    %v265 = vsel %vm264, 1, 0
    %vm266 = vcmp.eq.f32.partialorder %v191, %v263
    %vm267 = vcmp.lt.s32.totalorder %v193, 3
    %vm268 = vmand %vm266, %vm267
    %v269 = vsel %vm268, 1, 0
    %v270 = vadd.s32 %v265, %v269
    %v271 = vrot.slane %v270, 4
    %v272 = vadd.s32 %v270, %v271
    %v273 = vrot.slane %v272, 2
    %v274 = vadd.s32 %v272, %v273
    %v275 = vrot.slane %v274, 1
    %v276 = vadd.s32 %v274, %v275
    %vm277 = vcmp.eq.s32.totalorder %v193, %v276
    %v278 = vsel %vm277, 1, 0
    %v279 = vcvt.s32.f32 %v278
    %v280 = vmul.f32 %v263, %v279
    %v281 = vadd.f32 %v259, %v280
    %v282 = vlaneseq
    %v283 = vshrl.u32 %v282, 7
    %v284 = vsub.s32 4, %v283
    %v285 = vrot.slane %v191, %v284
    %vm286 = vcmp.lt.f32.partialorder %v191, %v285
    %v287 = vsel %vm286, 1, 0
    %vm288 = vcmp.eq.f32.partialorder %v191, %v285
    %vm289 = vcmp.lt.s32.totalorder %v193, 4
    %vm290 = vmand %vm288, %vm289
    %v291 = vsel %vm290, 1, 0
    %v292 = vadd.s32 %v287, %v291
    %v293 = vrot.slane %v292, 4
    %v294 = vadd.s32 %v292, %v293
    %v295 = vrot.slane %v294, 2
    %v296 = vadd.s32 %v294, %v295
    %v297 = vrot.slane %v296, 1
    %v298 = vadd.s32 %v296, %v297
    %vm299 = vcmp.eq.s32.totalorder %v193, %v298
    %v300 = vsel %vm299, 1, 0
    %v301 = vcvt.s32.f32 %v300
    %v302 = vmul.f32 %v285, %v301
    %v303 = vadd.f32 %v281, %v302
    %v304 = vlaneseq
    %v305 = vshrl.u32 %v304, 7
    %v306 = vsub.s32 5, %v305
    %v307 = vrot.slane %v191, %v306
    %vm308 = vcmp.lt.f32.partialorder %v191, %v307
    %v309 = vsel %vm308, 1, 0
    %vm310 = vcmp.eq.f32.partialorder %v191, %v307
    %vm311 = vcmp.lt.s32.totalorder %v193, 5
    %vm312 = vmand %vm310, %vm311
    %v313 = vsel %vm312, 1, 0
    %v314 = vadd.s32 %v309, %v313
    %v315 = vrot.slane %v314, 4
    %v316 = vadd.s32 %v314, %v315
    %v317 = vrot.slane %v316, 2
    %v318 = vadd.s32 %v316, %v317
    %v319 = vrot.slane %v318, 1
    %v320 = vadd.s32 %v318, %v319
    %vm321 = vcmp.eq.s32.totalorder %v193, %v320
    %v322 = vsel %vm321, 1, 0
    %v323 = vcvt.s32.f32 %v322
    %v324 = vmul.f32 %v307, %v323
    %v325 = vadd.f32 %v303, %v324
    %v326 = vlaneseq
    %v327 = vshrl.u32 %v326, 7
    %v328 = vsub.s32 6, %v327
    %v329 = vrot.slane %v191, %v328
    %vm330 = vcmp.lt.f32.partialorder %v191, %v329
    %v331 = vsel %vm330, 1, 0
    %vm332 = vcmp.eq.f32.partialorder %v191, %v329
    %vm333 = vcmp.lt.s32.totalorder %v193, 6
    %vm334 = vmand %vm332, %vm333
    %v335 = vsel %vm334, 1, 0
    %v336 = vadd.s32 %v331, %v335
    %v337 = vrot.slane %v336, 4
    %v338 = vadd.s32 %v336, %v337
    %v339 = vrot.slane %v338, 2
    %v340 = vadd.s32 %v338, %v339
    %v341 = vrot.slane %v340, 1
    %v342 = vadd.s32 %v340, %v341
    %vm343 = vcmp.eq.s32.totalorder %v193, %v342
    %v344 = vsel %vm343, 1, 0
    %v345 = vcvt.s32.f32 %v344
    %v346 = vmul.f32 %v329, %v345
    %v347 = vadd.f32 %v325, %v346
    %v348 = vlaneseq
    %v349 = vshrl.u32 %v348, 7
    %v350 = vsub.s32 7, %v349
    %v351 = vrot.slane %v191, %v350
    %vm352 = vcmp.lt.f32.partialorder %v191, %v351
    %v353 = vsel %vm352, 1, 0
    %vm354 = vcmp.eq.f32.partialorder %v191, %v351
    %vm355 = vcmp.lt.s32.totalorder %v193, 7
    %vm356 = vmand %vm354, %vm355
    %v357 = vsel %vm356, 1, 0
    %v358 = vadd.s32 %v353, %v357
    %v359 = vrot.slane %v358, 4
    %v360 = vadd.s32 %v358, %v359
    %v361 = vrot.slane %v360, 2
    %v362 = vadd.s32 %v360, %v361
    %v363 = vrot.slane %v362, 1
    %v364 = vadd.s32 %v362, %v363
    %vm365 = vcmp.eq.s32.totalorder %v193, %v364
    %v366 = vsel %vm365, 1, 0
    %v367 = vcvt.s32.f32 %v366
    %v368 = vmul.f32 %v351, %v367
    %v369 = vadd.f32 %v347, %v368
    %371 = vrot.lane.b32.xlu0 %v369, 64
    %v372 = vpop.permute.xlu0 %371
    %v374 = vsub.f32 %v369, %v372
    %v375 = vmul.f32 %v374, %v374
    %v376 = vsel %vm190, %v375, 0.0
    %377 = vadd.xlane.f32.xlu0 %v376
    %v378 = vpop.xlane.xlu0 %377
    %v379 = vrot.slane %v378, 4
    %v380 = vadd.f32 %v378, %v379
    %v381 = vrot.slane %v380, 2
    %v382 = vadd.f32 %v380, %v381
    %v383 = vrot.slane %v382, 1
    %v384 = vadd.f32 %v382, %v383
    %v385 = vmul.f32 %v384, 0.0025
    %s386 = sld [smem:[#allocation2]]
    %v387 = vsub.f32 0.0, %v101
    %v388 = vadd.f32 %v101, 1e-08
    %v389 = vlog2.pop %v388
    %v390 = vmul.f32 %v389, 0.6931472
    %v391 = vmul.f32 %v387, %v390
    %v392 = vsel %vm82, %v391, 0.0
    %393 = vadd.xlane.f32.xlu0 %v392
    %v394 = vpop.xlane.xlu0 %393
    %v395 = vrot.slane %v394, 4
    %v396 = vadd.f32 %v394, %v395
    %v397 = vrot.slane %v396, 2
    %v398 = vadd.f32 %v396, %v397
    %v399 = vrot.slane %v398, 1
    %v400 = vadd.f32 %v398, %v399
    %v401 = vrcp.pop 256.0
    %s402 = vtos %v401
    %s403 = smul.f32 %s386, %s402
    %v404 = vstv %s403
    %v405 = vmul.f32 %v400, %v404
    %vm406 = vcmask 7168
    %v407 = vsel %vm406, %v385, %v405
    %vm408 = vcmask 8192
    %409 = vst.msk [vmem:[#allocation14] sm:$0x1] %vm408, %v407
    // Predicated region
    $region38: #{_latent_call.1} parent=1 // pred_check
      _
    $region39: #{_latent_call.1} parent=1 // pred_check_branch
      %411 = sbr.rel (0) target = $region41
    $region40: #{_latent_call.1} parent=1 // pred_region
      %s413 = ssub.s32 128, 128
      %414 = vsyncadd [#allocation5], %s413
      %s416 = sshll.u32 [#allocation11], 4
      %s417 = int_to_ptr.vmem [resolvable:$true] %s416
      %419 = dma.vmem_to_hbm [thread:$0]  %s417, 128, %s5, [#allocation5]
    $region41: #{_latent_call.1} parent=1 // pred_fallthru
      _
    // Predicated region
    $region42: #{_latent_call.1} parent=1 // pred_check
      _
    $region43: #{_latent_call.1} parent=1 // pred_check_branch
      %421 = sbr.rel (0) target = $region45
    $region44: #{_latent_call.1} parent=1 // pred_region
      %s423 = ssub.s32 128, 128
      %424 = vsyncadd [#allocation13], %s423
      %s426 = sshll.u32 [#allocation12], 4
      %s427 = int_to_ptr.vmem [resolvable:$true] %s426
      %429 = dma.vmem_to_hbm [thread:$0]  %s427, 128, %s6, [#allocation13]
    $region45: #{_latent_call.1} parent=1 // pred_fallthru
      _
    // Predicated region
    $region46: #{_latent_call.1} parent=1 // pred_check
      _
    $region47: #{_latent_call.1} parent=1 // pred_check_branch
      %431 = sbr.rel (0) target = $region49
    $region48: #{_latent_call.1} parent=1 // pred_region
      %s433 = ssub.s32 16, 16
      %434 = vsyncadd [#allocation13], %s433
      %s436 = sshll.u32 [#allocation14], 4
      %s437 = int_to_ptr.vmem [resolvable:$true] %s436
      %439 = dma.vmem_to_hbm [thread:$0]  %s437, 16, %s7, [#allocation13]
    $region49: #{_latent_call.1} parent=1 // pred_fallthru
      _
    // Predicated region
    $region50: #{_latent_call.1} parent=1 // pred_check
      _
    $region51: #{_latent_call.1} parent=1 // pred_check_branch
      %441 = sbr.rel (0) target = $region53
    $region52: #{_latent_call.1} parent=1 // pred_region
      %442 = dma.done [#allocation5], 128
    $region53: #{_latent_call.1} parent=1 // pred_fallthru
      _
    // Predicated region
    $region54: #{_latent_call.1} parent=1 // pred_check
      _
    $region55: #{_latent_call.1} parent=1 // pred_check_branch
      %444 = sbr.rel (0) target = $region57
    $region56: #{_latent_call.1} parent=1 // pred_region
      %445 = dma.done [#allocation13], 128
    $region57: #{_latent_call.1} parent=1 // pred_fallthru
      _
    // Predicated region
    $region58: #{_latent_call.1} parent=1 // pred_check
      _
    $region59: #{_latent_call.1} parent=1 // pred_check_branch
      %447 = sbr.rel (0) target = $region61
    $region60: #{_latent_call.1} parent=1 // pred_region
      %448 = dma.done [#allocation13], 16
    $region61: #{_latent_call.1} parent=1 // pred_fallthru
      _
    %449 = vsyncpa [#allocation4], 1
    %450 = vsyncpa [#allocation7], 1
    %451 = vsyncpa [#allocation10], 1
    %452 = vsyncpa [#allocation5], 1
    %453 = vsyncpa [#allocation13], 1

</llo_original>
